<compile_context>
chip_gen: v5e
topology: v5e:2x2
jax: 0.10.0
libtpu: 0.0.40
codegen_flags: <defaults>
</compile_context>

<pallas_src>
import jax
import jax.numpy as jnp
from jax.experimental import pallas as pl
from jax.experimental.pallas import tpu as pltpu

_LANE = 128


def _round_up(n, m):
    return ((n + m - 1) // m) * m


def cvae_encoder_kernel(x_ref, w1_ref, b1_ref, w2_ref, b2_ref,
                        wh_ref, bh_ref, out_ref):
    # Everything is feature-major: features on sublanes, batch on lanes.
    x = x_ref[...]                                        # [d_in, TB]

    # block: Linear(z_dim+1 -> 4*latent) + ReLU.
    # K = d_in = 2 is tiny, but N = TB is lane-dense, so one small MXU pass
    # beats cross-lane VPU broadcasts of x columns.
    h = jnp.dot(w1_ref[...], x, preferred_element_type=jnp.float32) + b1_ref[...]
    h = jnp.maximum(h, 0.0)                               # [d_hid, TB]

    # block: Linear(4*latent -> latent) + Tanh (tanh runs on the EUP).
    latent = jnp.tanh(
        jnp.dot(w2_ref[...], h, preferred_element_type=jnp.float32) + b2_ref[...]
    )                                                     # [latent, TB]

    # Fused heads: rows [:latent] = mean, rows [latent:] = log_var.
    # Last dim is TB (multiple of 128) -> lane-dense, unmasked stores.
    out_ref[...] = (
        jnp.dot(wh_ref[...], latent, preferred_element_type=jnp.float32) + bh_ref[...]
    ).astype(out_ref.dtype)                               # [2*latent, TB]


def cvae_encoder(x, params, *, batch_tile=16384):
    """x: [B, z_dim+1] float32. Returns (mean, log_var), each [B, latent_dim]."""
    B, d_in = x.shape
    d_hid = params["w1t"].shape[0]
    latent_dim = params["w2t"].shape[0]
    d_out = 2 * latent_dim

    # Batch tile: lane-dense (multiple of 128), capped so huge batches
    # pipeline through HBM; sweepable via batch_tile.
    TB = _round_up(min(batch_tile, _round_up(B, _LANE)), _LANE)
    Bp = _round_up(B, TB)
    # v7x megacore: guarantee >=2 "parallel" steps when the batch is big
    # enough to split (harmless on v5e/v6e, skipped for tiny batches).
    if Bp // TB < 2 and Bp > _LANE:
        TB = _round_up(-(-Bp // 2), _LANE)
        Bp = _round_up(B, TB)
    grid = (Bp // TB,)

    # Feature-major input [d_in, Bp]; the transpose + pad touch only
    # d_in * Bp * 4 bytes — tiny next to the 2*latent-wide output stream.
    xt = x.T
    if Bp != B:
        xt = jnp.pad(xt, ((0, 0), (0, Bp - B)))

    def moving(rows):       # x / out tiles: advance along the batch (lane) axis
        return pl.BlockSpec((rows, TB), lambda i: (0, i))

    def resident(arr):      # weights/biases: constant block index -> stay in VMEM
        return pl.BlockSpec(arr.shape, lambda i: (0, 0))

    flops = 2 * Bp * (d_in * d_hid + d_hid * latent_dim + latent_dim * d_out)
    weight_bytes = sum(
        int(params[k].size) * 4 for k in ("w1t", "b1c", "w2t", "b2c", "wht", "bhc")
    )
    bytes_accessed = Bp * (d_in + d_out) * 4 + weight_bytes

    out = pl.pallas_call(
        cvae_encoder_kernel,
        out_shape=jax.ShapeDtypeStruct((d_out, Bp), jnp.float32),
        grid=grid,
        in_specs=[
            moving(d_in),
            resident(params["w1t"]), resident(params["b1c"]),
            resident(params["w2t"]), resident(params["b2c"]),
            resident(params["wht"]), resident(params["bhc"]),
        ],
        out_specs=moving(d_out),
        compiler_params=pltpu.CompilerParams(
            dimension_semantics=("parallel",),   # shard batch steps over TCs (v7x)
        ),
        cost_estimate=pl.CostEstimate(
            flops=flops,
            transcendentals=Bp * latent_dim,     # tanh
            bytes_accessed=bytes_accessed,
        ),
    )(
        xt,
        params["w1t"], params["b1c"],
        params["w2t"], params["b2c"],
        params["wht"], params["bhc"],
    )

    # Module contract: two batch-major [B, latent] tensors.
    # TODO(synk): downstream could consume the fused [2*latent, B] slab directly
    # and skip these two transposed slice copies.
    mean = out[:latent_dim, :B].T
    log_var = out[latent_dim:, :B].T
    return mean, log_var


def init_params(key, z_dim=1, latent_dim=10):
    """Deterministic synthetic params matching CVAE_ENCODER.__init__ shapes.

    Mimics PyTorch's default Linear init: U(-1/sqrt(fan_in), 1/sqrt(fan_in)).
    Reference-form weights are [in, out]; the kernel uses feature-major
    (transposed) weights [out, in] and [out, 1] bias columns, with the two
    head Linears fused into a single [2*latent, latent] weight.
    """
    d_in = z_dim + 1
    d_hid = latent_dim * 4

    def linear(k, fan_in, fan_out):
        kw, kb = jax.random.split(k)
        bound = 1.0 / jnp.sqrt(fan_in)
        w = jax.random.uniform(kw, (fan_in, fan_out), jnp.float32, -bound, bound)
        b = jax.random.uniform(kb, (1, fan_out), jnp.float32, -bound, bound)
        return w, b

    k1, k2, k3, k4 = jax.random.split(key, 4)
    w1, b1 = linear(k1, d_in, d_hid)             # Linear(z_dim+1, latent_dim*4)
    w2, b2 = linear(k2, d_hid, latent_dim)       # Linear(latent_dim*4, latent_dim)
    wm, bm = linear(k3, latent_dim, latent_dim)  # mean_out Linear
    wv, bv = linear(k4, latent_dim, latent_dim)  # log_var_out Linear

    # Kernel (feature-major) forms, built once at construction.
    w1t = w1.T                                    # [d_hid, d_in]
    b1c = b1.T                                    # [d_hid, 1]
    w2t = w2.T                                    # [latent, d_hid]
    b2c = b2.T                                    # [latent, 1]
    wht = jnp.concatenate([wm.T, wv.T], axis=0)   # [2*latent, latent]
    bhc = jnp.concatenate([bm.T, bv.T], axis=0)   # [2*latent, 1]

    return {
        # reference-form (PyTorch-like) params
        "w1": w1, "b1": b1, "w2": w2, "b2": b2,
        "wm": wm, "bm": bm, "wv": wv, "bv": bv,
        # kernel-form params
        "w1t": w1t, "b1c": b1c, "w2t": w2t, "b2c": b2c, "wht": wht, "bhc": bhc,
    }


def cvae_encoder_ref(x, p):
    """Pure-JAX reference mirroring the PyTorch module (unfused heads)."""
    h = jnp.maximum(x @ p["w1"] + p["b1"], 0.0)
    latent = jnp.tanh(h @ p["w2"] + p["b2"])
    return latent @ p["wm"] + p["bm"], latent @ p["wv"] + p["bv"]


if __name__ == "__main__":
    z_dim, latent_dim, batch = 1, 10, 8

    key = jax.random.PRNGKey(0)
    kx, kp = jax.random.split(key)

    x = jax.random.normal(kx, (batch, z_dim + 1), jnp.float32)
    params = init_params(kp, z_dim=z_dim, latent_dim=latent_dim)

    mean, log_var = cvae_encoder(x, params)
    jax.block_until_ready((mean, log_var))

    mean_ref, log_var_ref = cvae_encoder_ref(x, params)
    assert mean.shape == (batch, latent_dim)
    assert log_var.shape == (batch, latent_dim)
    assert jnp.allclose(mean, mean_ref, atol=1e-5, rtol=1e-5)
    assert jnp.allclose(log_var, log_var_ref, atol=1e-5, rtol=1e-5)

    print("KERNEL_OK")
</pallas_src>

<mosaic_0001>
module attributes {stable_mosaic.version = 11 : i64} {
  func.func @cvae_encoder_kernel(%arg0: i32, %arg1: memref<2x128xf32, #tpu.memory_space<vmem>>, %arg2: memref<40x2xf32, #tpu.memory_space<vmem>>, %arg3: memref<40x1xf32, #tpu.memory_space<vmem>>, %arg4: memref<10x40xf32, #tpu.memory_space<vmem>>, %arg5: memref<10x1xf32, #tpu.memory_space<vmem>>, %arg6: memref<20x10xf32, #tpu.memory_space<vmem>>, %arg7: memref<20x1xf32, #tpu.memory_space<vmem>>, %arg8: memref<20x128xf32, #tpu.memory_space<vmem>>) attributes {dimension_semantics = [#tpu.dimension_semantics<parallel>], iteration_bounds = array<i64: 1>, scalar_prefetch = 0 : i64, scratch_operands = 0 : i64, tpu.core_type = #tpu.core_type<tc>, window_params = [{transform_indices = @transform_0, window_bounds = array<i64: 2, 128>}, {pipeline_mode = #tpu.pipeline_mode<synchronous>, transform_indices = @transform_1, window_bounds = array<i64: 40, 2>}, {pipeline_mode = #tpu.pipeline_mode<synchronous>, transform_indices = @transform_2, window_bounds = array<i64: 40, 1>}, {pipeline_mode = #tpu.pipeline_mode<synchronous>, transform_indices = @transform_3, window_bounds = array<i64: 10, 40>}, {pipeline_mode = #tpu.pipeline_mode<synchronous>, transform_indices = @transform_4, window_bounds = array<i64: 10, 1>}, {pipeline_mode = #tpu.pipeline_mode<synchronous>, transform_indices = @transform_5, window_bounds = array<i64: 20, 10>}, {pipeline_mode = #tpu.pipeline_mode<synchronous>, transform_indices = @transform_6, window_bounds = array<i64: 20, 1>}, {transform_indices = @transform_7, window_bounds = array<i64: 20, 128>}]} {
    %c0 = arith.constant 0 : index
    %c0_0 = arith.constant 0 : index
    %0 = vector.load %arg1[%c0, %c0_0] : memref<2x128xf32, #tpu.memory_space<vmem>>, vector<2x128xf32>
    %c0_1 = arith.constant 0 : index
    %c0_2 = arith.constant 0 : index
    %1 = vector.load %arg2[%c0_1, %c0_2] : memref<40x2xf32, #tpu.memory_space<vmem>>, vector<40x2xf32>
    %cst = arith.constant dense<0.000000e+00> : vector<40x128xf32>
    %2 = tpu.matmul %1, %0, %cst {dimension_numbers = #tpu.dot_dimension_numbers<[1], [0], [0], [1], [0, 0, 1, 1], [], []>} : vector<40x2xf32>, vector<2x128xf32>, vector<40x128xf32> -> vector<40x128xf32>
    %c0_3 = arith.constant 0 : index
    %c0_4 = arith.constant 0 : index
    %3 = vector.load %arg3[%c0_3, %c0_4] : memref<40x1xf32, #tpu.memory_space<vmem>>, vector<40x1xf32>
    %4 = vector.broadcast %3 : vector<40x1xf32> to vector<40x128xf32>
    %5 = arith.addf %2, %4 : vector<40x128xf32>
    %cst_5 = arith.constant 0.000000e+00 : f32
    %6 = vector.broadcast %cst_5 : f32 to vector<40x128xf32>
    %7 = arith.maximumf %5, %6 : vector<40x128xf32>
    %c0_6 = arith.constant 0 : index
    %c0_7 = arith.constant 0 : index
    %8 = vector.load %arg4[%c0_6, %c0_7] : memref<10x40xf32, #tpu.memory_space<vmem>>, vector<10x40xf32>
    %cst_8 = arith.constant dense<0.000000e+00> : vector<10x128xf32>
    %9 = tpu.matmul %8, %7, %cst_8 {dimension_numbers = #tpu.dot_dimension_numbers<[1], [0], [0], [1], [0, 0, 1, 1], [], []>} : vector<10x40xf32>, vector<40x128xf32>, vector<10x128xf32> -> vector<10x128xf32>
    %c0_9 = arith.constant 0 : index
    %c0_10 = arith.constant 0 : index
    %10 = vector.load %arg5[%c0_9, %c0_10] : memref<10x1xf32, #tpu.memory_space<vmem>>, vector<10x1xf32>
    %11 = vector.broadcast %10 : vector<10x1xf32> to vector<10x128xf32>
    %12 = arith.addf %9, %11 : vector<10x128xf32>
    %13 = math.tanh %12 : vector<10x128xf32>
    %c0_11 = arith.constant 0 : index
    %c0_12 = arith.constant 0 : index
    %14 = vector.load %arg6[%c0_11, %c0_12] : memref<20x10xf32, #tpu.memory_space<vmem>>, vector<20x10xf32>
    %cst_13 = arith.constant dense<0.000000e+00> : vector<20x128xf32>
    %15 = tpu.matmul %14, %13, %cst_13 {dimension_numbers = #tpu.dot_dimension_numbers<[1], [0], [0], [1], [0, 0, 1, 1], [], []>} : vector<20x10xf32>, vector<10x128xf32>, vector<20x128xf32> -> vector<20x128xf32>
    %c0_14 = arith.constant 0 : index
    %c0_15 = arith.constant 0 : index
    %16 = vector.load %arg7[%c0_14, %c0_15] : memref<20x1xf32, #tpu.memory_space<vmem>>, vector<20x1xf32>
    %17 = vector.broadcast %16 : vector<20x1xf32> to vector<20x128xf32>
    %18 = arith.addf %15, %17 : vector<20x128xf32>
    %c0_16 = arith.constant 0 : index
    %c0_17 = arith.constant 0 : index
    %19 = vector.load %arg8[%c0_16, %c0_17] : memref<20x128xf32, #tpu.memory_space<vmem>>, vector<20x128xf32>
    tpu.vector_store %arg8[%c0_16, %c0_17], %18 {strides = array<i32>} : memref<20x128xf32, #tpu.memory_space<vmem>>, vector<20x128xf32>,
    return
  }
  func.func @transform_0(%arg0: i32) -> (i32, i32) {
    %c0_i32 = arith.constant 0 : i32
    %c0_i32_0 = arith.constant 0 : i32
    return %c0_i32, %arg0 : i32, i32
  }
  func.func @transform_1(%arg0: i32) -> (i32, i32) {
    %c0_i32 = arith.constant 0 : i32
    %c0_i32_0 = arith.constant 0 : i32
    %c0_i32_1 = arith.constant 0 : i32
    return %c0_i32, %c0_i32_0 : i32, i32
  }
  func.func @transform_2(%arg0: i32) -> (i32, i32) {
    %c0_i32 = arith.constant 0 : i32
    %c0_i32_0 = arith.constant 0 : i32
    %c0_i32_1 = arith.constant 0 : i32
    return %c0_i32, %c0_i32_0 : i32, i32
  }
  func.func @transform_3(%arg0: i32) -> (i32, i32) {
    %c0_i32 = arith.constant 0 : i32
    %c0_i32_0 = arith.constant 0 : i32
    %c0_i32_1 = arith.constant 0 : i32
    return %c0_i32, %c0_i32_0 : i32, i32
  }
  func.func @transform_4(%arg0: i32) -> (i32, i32) {
    %c0_i32 = arith.constant 0 : i32
    %c0_i32_0 = arith.constant 0 : i32
    %c0_i32_1 = arith.constant 0 : i32
    return %c0_i32, %c0_i32_0 : i32, i32
  }
  func.func @transform_5(%arg0: i32) -> (i32, i32) {
    %c0_i32 = arith.constant 0 : i32
    %c0_i32_0 = arith.constant 0 : i32
    %c0_i32_1 = arith.constant 0 : i32
    return %c0_i32, %c0_i32_0 : i32, i32
  }
  func.func @transform_6(%arg0: i32) -> (i32, i32) {
    %c0_i32 = arith.constant 0 : i32
    %c0_i32_0 = arith.constant 0 : i32
    %c0_i32_1 = arith.constant 0 : i32
    return %c0_i32, %c0_i32_0 : i32, i32
  }
  func.func @transform_7(%arg0: i32) -> (i32, i32) {
    %c0_i32 = arith.constant 0 : i32
    %c0_i32_0 = arith.constant 0 : i32
    return %c0_i32, %arg0 : i32, i32
  }
}

</mosaic_0001>

<llo_original>
// kernel: tpu_custom_call.1
$region0: #{tpu_custom_call.1}
  #allocation0 [shape = 'u32[]', space=smem, size = 0x4, offset = 0x4, fixed_abs, tag = 'smem constant byte address 0x4 - core index']
  #allocation1 [shape = 'u32[72,128]{1,0:T(1,128)}', space=vmem, size = 0x9000, scoped, tag = 'internal scratch']
  %s0 = inlined_call_operand.vmem [shape: f32[2,128], index: 0, kind: input, shape index: {}]
  %s1 = inlined_call_operand.vmem [shape: f32[40,2], index: 1, kind: input, shape index: {}]
  %s2 = inlined_call_operand.vmem [shape: f32[40,1], index: 2, kind: input, shape index: {}]
  %s3 = inlined_call_operand.vmem [shape: f32[10,40], index: 3, kind: input, shape index: {}]
  %s4 = inlined_call_operand.vmem [shape: f32[10,1], index: 4, kind: input, shape index: {}]
  %s5 = inlined_call_operand.vmem [shape: f32[20,10], index: 5, kind: input, shape index: {}]
  %s6 = inlined_call_operand.vmem [shape: f32[20,1], index: 6, kind: input, shape index: {}]
  %s7 = inlined_call_operand.hbm [shape: f32[20,128], index: 7, kind: output, shape index: {}]
  %s8 = sld [smem:[#allocation0]]
  $region38: #{tpu_custom_call.1} parent=0
    _
  %s10 = ssub.s32 1, %s8
  %s11 = scalar_select 0, %s10, %s8
  $region1: #{tpu_custom_call.1} parent=0
    #allocation2 [shape = 'u8[12288]{0}', space=vmem, size = 0x3000, scoped, tag = 'output window, operand 0, single buffered']
    #allocation3 [shape = 's32[1]{0}', space=sflag, size = 0x4, scoped, tag = 'scoped memory for tpu_custom_call.1']
    %12 = vsyncpa [#allocation3], 0
    // Predicated region
    $region2: #{tpu_custom_call.1} parent=1 // pred_check
      _
    $region3: #{tpu_custom_call.1} parent=1 // pred_check_branch
      %14 = sbr.rel (0) target = $region5
    $region4: #{tpu_custom_call.1} parent=1 // pred_region
      _
    $region5: #{tpu_custom_call.1} parent=1 // pred_fallthru
      _
    // Predicated region
    $region6: #{tpu_custom_call.1} parent=1 // pred_check
      _
    $region7: #{tpu_custom_call.1} parent=1 // pred_check_branch
      %16 = sbr.rel (0) target = $region9
    $region8: #{tpu_custom_call.1} parent=1 // pred_region
      _
    $region9: #{tpu_custom_call.1} parent=1 // pred_fallthru
      _
    // Predicated region
    $region10: #{tpu_custom_call.1} parent=1 // pred_check
      _
    $region11: #{tpu_custom_call.1} parent=1 // pred_check_branch
      %18 = sbr.rel (0) target = $region13
    $region12: #{tpu_custom_call.1} parent=1 // pred_region
      _
    $region13: #{tpu_custom_call.1} parent=1 // pred_fallthru
      _
    // Predicated region
    $region14: #{tpu_custom_call.1} parent=1 // pred_check
      _
    $region15: #{tpu_custom_call.1} parent=1 // pred_check_branch
      %20 = sbr.rel (0) target = $region17
    $region16: #{tpu_custom_call.1} parent=1 // pred_region
      _
    $region17: #{tpu_custom_call.1} parent=1 // pred_fallthru
      _
    // Predicated region
    $region18: #{tpu_custom_call.1} parent=1 // pred_check
      _
    $region19: #{tpu_custom_call.1} parent=1 // pred_check_branch
      %22 = sbr.rel (0) target = $region21
    $region20: #{tpu_custom_call.1} parent=1 // pred_region
      _
    $region21: #{tpu_custom_call.1} parent=1 // pred_fallthru
      _
    // Predicated region
    $region22: #{tpu_custom_call.1} parent=1 // pred_check
      _
    $region23: #{tpu_custom_call.1} parent=1 // pred_check_branch
      %24 = sbr.rel (0) target = $region25
    $region24: #{tpu_custom_call.1} parent=1 // pred_region
      _
    $region25: #{tpu_custom_call.1} parent=1 // pred_fallthru
      _
    // Predicated region
    $region26: #{tpu_custom_call.1} parent=1 // pred_check
      _
    $region27: #{tpu_custom_call.1} parent=1 // pred_check_branch
      %26 = sbr.rel (0) target = $region29
    $region28: #{tpu_custom_call.1} parent=1 // pred_region
      _
    $region29: #{tpu_custom_call.1} parent=1 // pred_fallthru
      _
    %v27 = vld [vmem:[%s0] sm:$0x3]
    %v28 = vld [vmem:[%s1] sm:$0xff]
    %v29 = vld [vmem:[%s1 + $0x8] sm:$0xff]
    %v30 = vld [vmem:[%s1 + $0x10] sm:$0xff]
    %v31 = vld [vmem:[%s1 + $0x18] sm:$0xff]
    %v32 = vld [vmem:[%s1 + $0x20] sm:$0xff]
    %v33 = vld [vmem:[%s2] sm:$0xff]
    %v34 = vld [vmem:[%s2 + $0x8] sm:$0xff]
    %v35 = vld [vmem:[%s2 + $0x10] sm:$0xff]
    %v36 = vld [vmem:[%s2 + $0x18] sm:$0xff]
    %v37 = vld [vmem:[%s2 + $0x20] sm:$0xff]
    %39 = vset.pattern.permute.xlu0 0
    %40 = vperm.xlu0 %39, %v33
    %v41 = vpop.permute.xlu0 %40
    %44 = vset.pattern.permute.xlu0 0
    %45 = vperm.xlu0 %44, %v34
    %v46 = vpop.permute.xlu0 %45
    %49 = vset.pattern.permute.xlu0 0
    %50 = vperm.xlu0 %49, %v35
    %v51 = vpop.permute.xlu0 %50
    %54 = vset.pattern.permute.xlu0 0
    %55 = vperm.xlu0 %54, %v36
    %v56 = vpop.permute.xlu0 %55
    %59 = vset.pattern.permute.xlu0 0
    %60 = vperm.xlu0 %59, %v37
    %v61 = vpop.permute.xlu0 %60
    %vm63 = vcmask 15360
    %v65 = vsel %vm63, %v28, 0
    %v68 = vsel %vm63, %v29, 0
    %v71 = vsel %vm63, %v30, 0
    %v74 = vsel %vm63, %v31, 0
    %v77 = vsel %vm63, %v32, 0
    %vm79 = vcmask 1041408
    %v81 = vsel %vm79, %v27, 0
    %83 = vmatpush.msra.mxu0 0.0
    %84 = vmatpush.msra.mxu0 0.0
    %85 = vmatpush.msra.mxu0 0.0
    %86 = vmatpush.msra.mxu0 0.0
    %87 = vmatpush.msra.mxu0 0.0
    %88 = vmatpush.msra.mxu0 0.0
    %89 = vmatpush.msra.mxu0 0.0
    %90 = vmatpush.msra.mxu0 0.0
    %91 = vmatpush.msra.mxu0 0.0
    %92 = vmatpush.msra.mxu0 0.0
    %93 = vmatpush.msra.mxu0 0.0
    %94 = vmatpush.msra.mxu0 0.0
    %95 = vmatpush.msra.mxu0 0.0
    %96 = vmatpush.msra.mxu0 0.0
    %97 = vmatpush.msra.mxu0 0.0
    %98 = vmatpush.msra.mxu0 %v81
    %99 = vmatmul.f32.gmra.mxu0 %v65
    %v100 = vpop.f32.mrf.mxu0
    %v101 = vadd.f32 %v41, %v100
    %102 = vmatmul.f32.gmra.mxu0 %v68
    %v103 = vpop.f32.mrf.mxu0
    %v104 = vadd.f32 %v46, %v103
    %105 = vmatmul.f32.gmra.mxu0 %v71
    %v106 = vpop.f32.mrf.mxu0
    %v107 = vadd.f32 %v51, %v106
    %108 = vmatmul.f32.gmra.mxu0 %v74
    %v109 = vpop.f32.mrf.mxu0
    %v110 = vadd.f32 %v56, %v109
    %111 = vmatmul.f32.gmra.mxu0 %v77
    %v112 = vpop.f32.mrf.mxu0
    %v113 = vadd.f32 %v61, %v112
    %114 = vdwg.mxu0
    %v115 = vmax.f32 %v101, 0.0
    %v116 = vmax.f32 %v104, 0.0
    %v117 = vmax.f32 %v107, 0.0
    %v118 = vmax.f32 %v110, 0.0
    %v119 = vmax.f32 %v113, 0.0
    %v120 = vld [vmem:[%s3] sm:$0xff]
    %v121 = vld [vmem:[%s3 + $0x8] sm:$0x3]
    %v122 = vld [vmem:[%s4] sm:$0xff]
    %v123 = vld [vmem:[%s4 + $0x8] sm:$0x3]
    %125 = vset.pattern.permute.xlu0 0
    %126 = vperm.xlu0 %125, %v122
    %v127 = vpop.permute.xlu0 %126
    %130 = vset.pattern.permute.xlu0 0
    %131 = vperm.xlu0 %130, %v123
    %v132 = vpop.permute.xlu0 %131
    %vm134 = vcmask 326656
    %v136 = vsel %vm134, %v120, 0
    %v139 = vsel %vm134, %v121, 0
    %141 = vmatpush.msra.mxu0 0.0
    %142 = vmatpush.msra.mxu0 0.0
    %143 = vmatpush.msra.mxu0 0.0
    %144 = vmatpush.msra.mxu0 0.0
    %145 = vmatpush.msra.mxu0 0.0
    %146 = vmatpush.msra.mxu0 0.0
    %147 = vmatpush.msra.mxu0 0.0
    %148 = vmatpush.msra.mxu0 0.0
    %149 = vmatpush.msra.mxu0 0.0
    %150 = vmatpush.msra.mxu0 0.0
    %151 = vmatpush.msra.mxu0 0.0
    %152 = vmatpush.msra.mxu0 %v119
    %153 = vmatpush.msra.mxu0 %v118
    %154 = vmatpush.msra.mxu0 %v117
    %155 = vmatpush.msra.mxu0 %v116
    %156 = vmatpush.msra.mxu0 %v115
    %157 = vmatmul.f32.gmra.mxu0 %v136
    %v158 = vpop.f32.mrf.mxu0
    %v159 = vadd.f32 %v127, %v158
    %160 = vmatmul.f32.gmra.mxu0 %v139
    %v161 = vpop.f32.mrf.mxu0
    %v162 = vadd.f32 %v132, %v161
    %163 = vdwg.mxu0
    %v164 = vtanh.pop %v159
    %v165 = vtanh.pop %v162
    %v166 = vld [vmem:[%s5] sm:$0xff]
    %v167 = vld [vmem:[%s5 + $0x8] sm:$0xff]
    %v168 = vld [vmem:[%s5 + $0x10] sm:$0xf]
    %v169 = vld [vmem:[%s6] sm:$0xff]
    %v170 = vld [vmem:[%s6 + $0x8] sm:$0xff]
    %v171 = vld [vmem:[%s6 + $0x10] sm:$0xf]
    %173 = vset.pattern.permute.xlu0 0
    %174 = vperm.xlu0 %173, %v169
    %v175 = vpop.permute.xlu0 %174
    %178 = vset.pattern.permute.xlu0 0
    %179 = vperm.xlu0 %178, %v170
    %v180 = vpop.permute.xlu0 %179
    %183 = vset.pattern.permute.xlu0 0
    %184 = vperm.xlu0 %183, %v171
    %v185 = vpop.permute.xlu0 %184
    %vm187 = vcmask 80896
    %v189 = vsel %vm187, %v166, 0
    %v192 = vsel %vm187, %v167, 0
    %v195 = vsel %vm187, %v168, 0
    %v198 = vsel %vm79, %v165, 0
    %200 = vmatpush.msra.mxu0 0.0
    %201 = vmatpush.msra.mxu0 0.0
    %202 = vmatpush.msra.mxu0 0.0
    %203 = vmatpush.msra.mxu0 0.0
    %204 = vmatpush.msra.mxu0 0.0
    %205 = vmatpush.msra.mxu0 0.0
    %206 = vmatpush.msra.mxu0 0.0
    %207 = vmatpush.msra.mxu0 0.0
    %208 = vmatpush.msra.mxu0 0.0
    %209 = vmatpush.msra.mxu0 0.0
    %210 = vmatpush.msra.mxu0 0.0
    %211 = vmatpush.msra.mxu0 0.0
    %212 = vmatpush.msra.mxu0 0.0
    %213 = vmatpush.msra.mxu0 0.0
    %214 = vmatpush.msra.mxu0 %v198
    %215 = vmatpush.msra.mxu0 %v164
    %216 = vmatmul.f32.gmra.mxu0 %v189
    %v217 = vpop.f32.mrf.mxu0
    %v218 = vadd.f32 %v175, %v217
    %219 = vmatmul.f32.gmra.mxu0 %v192
    %v220 = vpop.f32.mrf.mxu0
    %v221 = vadd.f32 %v180, %v220
    %222 = vmatmul.f32.gmra.mxu0 %v195
    %v223 = vpop.f32.mrf.mxu0
    %v224 = vadd.f32 %v185, %v223
    %225 = vdwg.mxu0
    %226 = vst [vmem:[#allocation2] sm:$0xff] %v218
    %227 = vst [vmem:[#allocation2 + $0x8] sm:$0xff] %v221
    %228 = vst [vmem:[#allocation2 + $0x10] sm:$0xf] %v224
    // Predicated region
    $region30: #{tpu_custom_call.1} parent=1 // pred_check
      _
    $region31: #{tpu_custom_call.1} parent=1 // pred_check_branch
      %230 = sbr.rel (0) target = $region33
    $region32: #{tpu_custom_call.1} parent=1 // pred_region
      %232 = vsyncadd [#allocation3], 0
      %s233 = sshll.u32 [#allocation2], 4
      %s234 = int_to_ptr.vmem [resolvable:$true] %s233
      %s235 = sshll.u32 %s7, 4
      %s236 = int_to_ptr.hbm [resolvable:$true] %s235
      %241 = dma.vmem_to_hbm [thread:$0]  %s234, 384, %s236, [#allocation3], 128, 128, 8
    $region33: #{tpu_custom_call.1} parent=1 // pred_fallthru
      _
    // Predicated region
    $region34: #{tpu_custom_call.1} parent=1 // pred_check
      _
    $region35: #{tpu_custom_call.1} parent=1 // pred_check_branch
      %243 = sbr.rel (0) target = $region37
    $region36: #{tpu_custom_call.1} parent=1 // pred_region
      %245 = dma.done [#allocation3], 384
    $region37: #{tpu_custom_call.1} parent=1 // pred_fallthru
      _
    %246 = vsyncpa [#allocation3], 1

</llo_original>
